<compile_context>
chip_gen: v7x
topology: tpu7x:2x2x1
jax: 0.10.0
libtpu: 0.0.40
codegen_flags: <defaults>
</compile_context>

<pallas_src>
import functools

import jax
import jax.numpy as jnp
from jax.experimental import pallas as pl
from jax.experimental.pallas import tpu as pltpu

LANES = 128  # one lane-tile of filters per time step in the Toeplitz weight


def cnn_kernel(x_ref, w_ref, b_ref, o_ref):
    # x_ref: (TB, C*L)          activation tile, f32 (flat PyTorch NCL row)
    # w_ref: (C*L, L_out*128)   block-Toeplitz conv weight, bf16
    # b_ref: (1, 128)           conv bias (zero-padded past F), f32
    # o_ref: (TB, F)            output tile = max_t relu(conv(x) + b)[b, :, t]
    n_lanes = b_ref.shape[1]                       # 128
    l_out = w_ref.shape[1] // n_lanes              # number of valid time steps
    f_out = o_ref.shape[1]                         # num_filters

    xb = x_ref[...].astype(jnp.bfloat16)           # cast once, before the MXU
    acc = jnp.dot(xb, w_ref[...], preferred_element_type=jnp.float32)  # (TB, L_out*128)

    # Max over time: lane-tile-aligned static slices -> pure VPU max tree,
    # no reshape / relayout of the accumulator.
    m = acc[:, :n_lanes]
    for t in range(1, l_out):
        m = jnp.maximum(m, acc[:, t * n_lanes:(t + 1) * n_lanes])

    # Bias + ReLU after the max (bias is time-invariant, ReLU is monotone):
    #   relu(max_t(acc_t) + b) == max_t(relu(acc_t + b))
    m = jnp.maximum(m + b_ref[...], 0.0)

    o_ref[...] = m[:, :f_out].astype(o_ref.dtype)  # un-padded (TB, F) store


@functools.partial(jax.jit, static_argnames=("block_b",))
def cnn_forward(x_ncl, weight_fck, bias_f, *, block_b=1024):
    """x_ncl: (B, C, L) f32 (PyTorch NCL). Returns (B, F) f32 = maxpool(relu(conv(x)))."""
    B, C, L = x_ncl.shape
    F, _, K = weight_fck.shape
    L_out = L - K + 1
    CL = C * L
    assert F <= LANES, "num_filters must fit one lane tile"

    # One-time wrapper-side parameter prep: block-Toeplitz weight + padded bias.
    #   W_big[c*L + l, t*128 + f] = weight[f, c, l - t]  for 0 <= l - t < K, else 0
    w = jnp.zeros((L_out, LANES, C, L), jnp.float32)
    for t in range(L_out):
        w = w.at[t, :F, :, t:t + K].set(weight_fck)
    w_big = jnp.transpose(w, (2, 3, 0, 1)).reshape(CL, L_out * LANES).astype(jnp.bfloat16)
    b_pad = jnp.zeros((1, LANES), jnp.float32).at[0, :F].set(bias_f.astype(jnp.float32))

    x2d = x_ncl.reshape(B, CL)                     # contiguous reshape: no extra HBM pass

    TB = min(block_b, B)                           # batch tile (words per grid step)
    grid = (pl.cdiv(B, TB),)

    return pl.pallas_call(
        cnn_kernel,
        out_shape=jax.ShapeDtypeStruct((B, F), jnp.float32),
        grid=grid,
        in_specs=[
            pl.BlockSpec((TB, CL), lambda i: (i, 0)),             # activation tile
            pl.BlockSpec((CL, L_out * LANES), lambda i: (0, 0)),  # weight: grid-resident
            pl.BlockSpec((1, LANES), lambda i: (0, 0)),           # bias:   grid-resident
        ],
        out_specs=pl.BlockSpec((TB, F), lambda i: (i, 0)),
        compiler_params=pltpu.CompilerParams(
            dimension_semantics=("parallel",),                    # megacore: shard batch
        ),
    )(x2d, w_big, b_pad)


def cnn_reference(x_ncl, weight_fck, bias_f):
    """Pure-JAX (f32) reference of the PyTorch forward."""
    y = jax.lax.conv_general_dilated(
        x_ncl, weight_fck, window_strides=(1,), padding="VALID",
        dimension_numbers=("NCH", "OIH", "NCH"))
    y = y + bias_f[None, :, None]
    y = jnp.maximum(y, 0.0)
    return jnp.max(y, axis=-1)                     # maxpool over the full window + squeeze


if __name__ == "__main__":
    # Module hyper-parameters (small shapes consistent with the forward).
    batch = 2
    char_embed_size = 4     # in_channels
    num_filters = 8         # out_channels
    max_word_length = 16    # sequence length
    kernel_size = 5

    key = jax.random.PRNGKey(0)
    kx, kw, kb, kx2 = jax.random.split(key, 4)

    x = jax.random.normal(kx, (batch, char_embed_size, max_word_length), dtype=jnp.float32)
    weight = jax.random.normal(
        kw, (num_filters, char_embed_size, kernel_size), dtype=jnp.float32) * 0.1
    bias = jax.random.normal(kb, (num_filters,), dtype=jnp.float32) * 0.1

    out = jax.block_until_ready(cnn_forward(x, weight, bias))
    ref = cnn_reference(x, weight, bias)
    assert out.shape == (batch, num_filters), out.shape
    # bf16 MXU operands with f32 accumulation -> bf16-level tolerance.
    assert jnp.allclose(out, ref, atol=2e-2, rtol=2e-2), float(jnp.max(jnp.abs(out - ref)))

    # Ragged-batch case (B % TB != 0): last grid block is partial; rows are
    # independent and OOB output stores are dropped, so results stay exact.
    B2 = 19
    x2 = jax.random.normal(kx2, (B2, char_embed_size, max_word_length), dtype=jnp.float32)
    out2 = jax.block_until_ready(cnn_forward(x2, weight, bias, block_b=8))
    ref2 = cnn_reference(x2, weight, bias)
    assert out2.shape == (B2, num_filters), out2.shape
    assert jnp.allclose(out2, ref2, atol=2e-2, rtol=2e-2), float(jnp.max(jnp.abs(out2 - ref2)))

    print("KERNEL_OK")
</pallas_src>

<mosaic_0001>
module attributes {stable_mosaic.version = 11 : i64} {
  func.func @cnn_kernel(%arg0: i32, %arg1: memref<2x64xf32, #tpu.memory_space<vmem>>, %arg2: memref<64x1536xbf16, #tpu.memory_space<vmem>>, %arg3: memref<1x128xf32, #tpu.memory_space<vmem>>, %arg4: memref<2x8xf32, #tpu.memory_space<vmem>>) attributes {dimension_semantics = [#tpu.dimension_semantics<parallel>], iteration_bounds = array<i64: 1>, scalar_prefetch = 0 : i64, scratch_operands = 0 : i64, tpu.core_type = #tpu.core_type<tc>, window_params = [{transform_indices = @transform_0, window_bounds = array<i64: 2, 64>}, {pipeline_mode = #tpu.pipeline_mode<synchronous>, transform_indices = @transform_1, window_bounds = array<i64: 64, 1536>}, {pipeline_mode = #tpu.pipeline_mode<synchronous>, transform_indices = @transform_2, window_bounds = array<i64: 1, 128>}, {transform_indices = @transform_3, window_bounds = array<i64: 2, 8>}]} {
    %c0 = arith.constant 0 : index
    %c0_0 = arith.constant 0 : index
    %0 = vector.load %arg1[%c0, %c0_0] : memref<2x64xf32, #tpu.memory_space<vmem>>, vector<2x64xf32>
    %1 = arith.truncf %0 : vector<2x64xf32> to vector<2x64xbf16>
    %c0_1 = arith.constant 0 : index
    %c0_2 = arith.constant 0 : index
    %2 = vector.load %arg2[%c0_1, %c0_2] : memref<64x1536xbf16, #tpu.memory_space<vmem>>, vector<64x1536xbf16>
    %cst = arith.constant dense<0.000000e+00> : vector<2x1536xf32>
    %3 = tpu.matmul %1, %2, %cst {dimension_numbers = #tpu.dot_dimension_numbers<[1], [0], [0], [1], [0, 0, 1, 1], [], []>} : vector<2x64xbf16>, vector<64x1536xbf16>, vector<2x1536xf32> -> vector<2x1536xf32>
    %4 = vector.extract_strided_slice %3 {offsets = [0, 0], sizes = [2, 128], strides = [1, 1]} : vector<2x1536xf32> to vector<2x128xf32>
    %5 = vector.extract_strided_slice %3 {offsets = [0, 128], sizes = [2, 128], strides = [1, 1]} : vector<2x1536xf32> to vector<2x128xf32>
    %6 = arith.maximumf %4, %5 : vector<2x128xf32>
    %7 = vector.extract_strided_slice %3 {offsets = [0, 256], sizes = [2, 128], strides = [1, 1]} : vector<2x1536xf32> to vector<2x128xf32>
    %8 = arith.maximumf %6, %7 : vector<2x128xf32>
    %9 = vector.extract_strided_slice %3 {offsets = [0, 384], sizes = [2, 128], strides = [1, 1]} : vector<2x1536xf32> to vector<2x128xf32>
    %10 = arith.maximumf %8, %9 : vector<2x128xf32>
    %11 = vector.extract_strided_slice %3 {offsets = [0, 512], sizes = [2, 128], strides = [1, 1]} : vector<2x1536xf32> to vector<2x128xf32>
    %12 = arith.maximumf %10, %11 : vector<2x128xf32>
    %13 = vector.extract_strided_slice %3 {offsets = [0, 640], sizes = [2, 128], strides = [1, 1]} : vector<2x1536xf32> to vector<2x128xf32>
    %14 = arith.maximumf %12, %13 : vector<2x128xf32>
    %15 = vector.extract_strided_slice %3 {offsets = [0, 768], sizes = [2, 128], strides = [1, 1]} : vector<2x1536xf32> to vector<2x128xf32>
    %16 = arith.maximumf %14, %15 : vector<2x128xf32>
    %17 = vector.extract_strided_slice %3 {offsets = [0, 896], sizes = [2, 128], strides = [1, 1]} : vector<2x1536xf32> to vector<2x128xf32>
    %18 = arith.maximumf %16, %17 : vector<2x128xf32>
    %19 = vector.extract_strided_slice %3 {offsets = [0, 1024], sizes = [2, 128], strides = [1, 1]} : vector<2x1536xf32> to vector<2x128xf32>
    %20 = arith.maximumf %18, %19 : vector<2x128xf32>
    %21 = vector.extract_strided_slice %3 {offsets = [0, 1152], sizes = [2, 128], strides = [1, 1]} : vector<2x1536xf32> to vector<2x128xf32>
    %22 = arith.maximumf %20, %21 : vector<2x128xf32>
    %23 = vector.extract_strided_slice %3 {offsets = [0, 1280], sizes = [2, 128], strides = [1, 1]} : vector<2x1536xf32> to vector<2x128xf32>
    %24 = arith.maximumf %22, %23 : vector<2x128xf32>
    %25 = vector.extract_strided_slice %3 {offsets = [0, 1408], sizes = [2, 128], strides = [1, 1]} : vector<2x1536xf32> to vector<2x128xf32>
    %26 = arith.maximumf %24, %25 : vector<2x128xf32>
    %c0_3 = arith.constant 0 : index
    %c0_4 = arith.constant 0 : index
    %27 = vector.load %arg3[%c0_3, %c0_4] : memref<1x128xf32, #tpu.memory_space<vmem>>, vector<1x128xf32>
    %28 = vector.broadcast %27 : vector<1x128xf32> to vector<2x128xf32>
    %29 = arith.addf %26, %28 : vector<2x128xf32>
    %cst_5 = arith.constant 0.000000e+00 : f32
    %30 = vector.broadcast %cst_5 : f32 to vector<2x128xf32>
    %31 = arith.maximumf %29, %30 : vector<2x128xf32>
    %32 = vector.extract_strided_slice %31 {offsets = [0, 0], sizes = [2, 8], strides = [1, 1]} : vector<2x128xf32> to vector<2x8xf32>
    %c0_6 = arith.constant 0 : index
    %c0_7 = arith.constant 0 : index
    %33 = vector.load %arg4[%c0_6, %c0_7] : memref<2x8xf32, #tpu.memory_space<vmem>>, vector<2x8xf32>
    tpu.vector_store %arg4[%c0_6, %c0_7], %32 {strides = array<i32>} : memref<2x8xf32, #tpu.memory_space<vmem>>, vector<2x8xf32>,
    return
  }
  func.func @transform_0(%arg0: i32) -> (i32, i32) {
    %c0_i32 = arith.constant 0 : i32
    %c0_i32_0 = arith.constant 0 : i32
    return %arg0, %c0_i32 : i32, i32
  }
  func.func @transform_1(%arg0: i32) -> (i32, i32) {
    %c0_i32 = arith.constant 0 : i32
    %c0_i32_0 = arith.constant 0 : i32
    %c0_i32_1 = arith.constant 0 : i32
    return %c0_i32, %c0_i32_0 : i32, i32
  }
  func.func @transform_2(%arg0: i32) -> (i32, i32) {
    %c0_i32 = arith.constant 0 : i32
    %c0_i32_0 = arith.constant 0 : i32
    %c0_i32_1 = arith.constant 0 : i32
    return %c0_i32, %c0_i32_0 : i32, i32
  }
  func.func @transform_3(%arg0: i32) -> (i32, i32) {
    %c0_i32 = arith.constant 0 : i32
    %c0_i32_0 = arith.constant 0 : i32
    return %arg0, %c0_i32 : i32, i32
  }
}

</mosaic_0001>

<llo_original>
// kernel: cnn_forward.1
$region0: #{cnn_forward.1}
  #allocation0 [shape = 'u32[]', space=smem, size = 0x4, offset = 0x4, fixed_abs, tag = 'smem constant byte address 0x4 - core index']
  #allocation1 [shape = 'u32[144,128]{1,0:T(1,128)}', space=vmem, size = 0x12000, scoped, tag = 'internal scratch']
  %s0 = inlined_call_operand.vmem [shape: f32[2,64], index: 0, kind: input, shape index: {}]
  %s1 = inlined_call_operand.vmem [shape: bf16[64,1536], index: 1, kind: input, shape index: {}]
  %s2 = inlined_call_operand.vmem [shape: f32[1,128], index: 2, kind: input, shape index: {}]
  %s3 = inlined_call_operand.hbm [shape: f32[2,8], index: 3, kind: output, shape index: {}]
  %s4 = sld [smem:[#allocation0]]
  $region22: #{cnn_forward.1} parent=0
    _
  %s6 = ssub.s32 1, %s4
  %s7 = scalar_select 0, %s6, %s4
  $region1: #{cnn_forward.1} parent=0
    #allocation2 [shape = 'u8[1024]{0}', space=vmem, size = 0x400, scoped, tag = 'output window, operand 0, single buffered']
    #allocation3 [shape = 's32[1]{0}', space=sflag, size = 0x4, scoped, tag = 'scoped memory for cnn_forward.1']
    %8 = vsyncpa [#allocation3], 0
    // Predicated region
    $region2: #{cnn_forward.1} parent=1 // pred_check
      _
    $region3: #{cnn_forward.1} parent=1 // pred_check_branch
      %10 = sbr.rel (0) target = $region5
    $region4: #{cnn_forward.1} parent=1 // pred_region
      _
    $region5: #{cnn_forward.1} parent=1 // pred_fallthru
      _
    // Predicated region
    $region6: #{cnn_forward.1} parent=1 // pred_check
      _
    $region7: #{cnn_forward.1} parent=1 // pred_check_branch
      %12 = sbr.rel (0) target = $region9
    $region8: #{cnn_forward.1} parent=1 // pred_region
      _
    $region9: #{cnn_forward.1} parent=1 // pred_fallthru
      _
    // Predicated region
    $region10: #{cnn_forward.1} parent=1 // pred_check
      _
    $region11: #{cnn_forward.1} parent=1 // pred_check_branch
      %14 = sbr.rel (0) target = $region13
    $region12: #{cnn_forward.1} parent=1 // pred_region
      _
    $region13: #{cnn_forward.1} parent=1 // pred_fallthru
      _
    %v16 = vld [vmem:[%s0] sm:$0x3]
    %v17 = vpack.c.bf16 %v16, %v16
    %v18 = vld [vmem:[%s1] sm:$0xff]
    %v19 = vld [vmem:[%s1 + $0x8] sm:$0xff]
    %v20 = vld [vmem:[%s1 + $0x10] sm:$0xff]
    %v21 = vld [vmem:[%s1 + $0x18] sm:$0xff]
    %v22 = vld [vmem:[%s1 + $0x20] sm:$0xff]
    %v23 = vld [vmem:[%s1 + $0x28] sm:$0xff]
    %v24 = vld [vmem:[%s1 + $0x30] sm:$0xff]
    %v25 = vld [vmem:[%s1 + $0x38] sm:$0xff]
    %v26 = vld [vmem:[%s1 + $0x40] sm:$0xff]
    %v27 = vld [vmem:[%s1 + $0x48] sm:$0xff]
    %v28 = vld [vmem:[%s1 + $0x50] sm:$0xff]
    %v29 = vld [vmem:[%s1 + $0x58] sm:$0xff]
    %v30 = vld [vmem:[%s1 + $0x60] sm:$0xff]
    %v31 = vld [vmem:[%s1 + $0x68] sm:$0xff]
    %v32 = vld [vmem:[%s1 + $0x70] sm:$0xff]
    %v33 = vld [vmem:[%s1 + $0x78] sm:$0xff]
    %v34 = vld [vmem:[%s1 + $0x80] sm:$0xff]
    %v35 = vld [vmem:[%s1 + $0x88] sm:$0xff]
    %v36 = vld [vmem:[%s1 + $0x90] sm:$0xff]
    %v37 = vld [vmem:[%s1 + $0x98] sm:$0xff]
    %v38 = vld [vmem:[%s1 + $0xa0] sm:$0xff]
    %v39 = vld [vmem:[%s1 + $0xa8] sm:$0xff]
    %v40 = vld [vmem:[%s1 + $0xb0] sm:$0xff]
    %v41 = vld [vmem:[%s1 + $0xb8] sm:$0xff]
    %v42 = vld [vmem:[%s1 + $0xc0] sm:$0xff]
    %v43 = vld [vmem:[%s1 + $0xc8] sm:$0xff]
    %v44 = vld [vmem:[%s1 + $0xd0] sm:$0xff]
    %v45 = vld [vmem:[%s1 + $0xd8] sm:$0xff]
    %v46 = vld [vmem:[%s1 + $0xe0] sm:$0xff]
    %v47 = vld [vmem:[%s1 + $0xe8] sm:$0xff]
    %v48 = vld [vmem:[%s1 + $0xf0] sm:$0xff]
    %v49 = vld [vmem:[%s1 + $0xf8] sm:$0xff]
    %v50 = vld [vmem:[%s1 + $0x100] sm:$0xff]
    %v51 = vld [vmem:[%s1 + $0x108] sm:$0xff]
    %v52 = vld [vmem:[%s1 + $0x110] sm:$0xff]
    %v53 = vld [vmem:[%s1 + $0x118] sm:$0xff]
    %v54 = vld [vmem:[%s1 + $0x120] sm:$0xff]
    %v55 = vld [vmem:[%s1 + $0x128] sm:$0xff]
    %v56 = vld [vmem:[%s1 + $0x130] sm:$0xff]
    %v57 = vld [vmem:[%s1 + $0x138] sm:$0xff]
    %v58 = vld [vmem:[%s1 + $0x140] sm:$0xff]
    %v59 = vld [vmem:[%s1 + $0x148] sm:$0xff]
    %v60 = vld [vmem:[%s1 + $0x150] sm:$0xff]
    %v61 = vld [vmem:[%s1 + $0x158] sm:$0xff]
    %v62 = vld [vmem:[%s1 + $0x160] sm:$0xff]
    %v63 = vld [vmem:[%s1 + $0x168] sm:$0xff]
    %v64 = vld [vmem:[%s1 + $0x170] sm:$0xff]
    %v65 = vld [vmem:[%s1 + $0x178] sm:$0xff]
    %v114 = vunpack.c.l.b16 %v18
    %v115 = vunpack.c.h.b16 %v18
    %v116 = vunpack.c.l.b16 %v19
    %v117 = vunpack.c.h.b16 %v19
    %v118 = vunpack.c.l.b16 %v20
    %v119 = vunpack.c.h.b16 %v20
    %v120 = vunpack.c.l.b16 %v21
    %v121 = vunpack.c.h.b16 %v21
    %v122 = vunpack.c.l.b16 %v22
    %v123 = vunpack.c.h.b16 %v22
    %v124 = vunpack.c.l.b16 %v23
    %v125 = vunpack.c.h.b16 %v23
    %v126 = vunpack.c.l.b16 %v24
    %v127 = vunpack.c.h.b16 %v24
    %v128 = vunpack.c.l.b16 %v25
    %v129 = vunpack.c.h.b16 %v25
    %v130 = vunpack.c.l.b16 %v26
    %v131 = vunpack.c.h.b16 %v26
    %v132 = vunpack.c.l.b16 %v27
    %v133 = vunpack.c.h.b16 %v27
    %v134 = vunpack.c.l.b16 %v28
    %v135 = vunpack.c.h.b16 %v28
    %v136 = vunpack.c.l.b16 %v29
    %v137 = vunpack.c.h.b16 %v29
    %v138 = vunpack.c.l.b16 %v30
    %v139 = vunpack.c.h.b16 %v30
    %v140 = vunpack.c.l.b16 %v31
    %v141 = vunpack.c.h.b16 %v31
    %v142 = vunpack.c.l.b16 %v32
    %v143 = vunpack.c.h.b16 %v32
    %v144 = vunpack.c.l.b16 %v33
    %v145 = vunpack.c.h.b16 %v33
    %v146 = vunpack.c.l.b16 %v34
    %v147 = vunpack.c.h.b16 %v34
    %v148 = vunpack.c.l.b16 %v35
    %v149 = vunpack.c.h.b16 %v35
    %v150 = vunpack.c.l.b16 %v36
    %v151 = vunpack.c.h.b16 %v36
    %v152 = vunpack.c.l.b16 %v37
    %v153 = vunpack.c.h.b16 %v37
    %v154 = vunpack.c.l.b16 %v38
    %v155 = vunpack.c.h.b16 %v38
    %v156 = vunpack.c.l.b16 %v39
    %v157 = vunpack.c.h.b16 %v39
    %v158 = vunpack.c.l.b16 %v40
    %v159 = vunpack.c.h.b16 %v40
    %v160 = vunpack.c.l.b16 %v41
    %v161 = vunpack.c.h.b16 %v41
    %v162 = vunpack.c.l.b16 %v42
    %v163 = vunpack.c.h.b16 %v42
    %v164 = vunpack.c.l.b16 %v43
    %v165 = vunpack.c.h.b16 %v43
    %v166 = vunpack.c.l.b16 %v44
    %v167 = vunpack.c.h.b16 %v44
    %v168 = vunpack.c.l.b16 %v45
    %v169 = vunpack.c.h.b16 %v45
    %v170 = vunpack.c.l.b16 %v46
    %v171 = vunpack.c.h.b16 %v46
    %v172 = vunpack.c.l.b16 %v47
    %v173 = vunpack.c.h.b16 %v47
    %v174 = vunpack.c.l.b16 %v48
    %v175 = vunpack.c.h.b16 %v48
    %v176 = vunpack.c.l.b16 %v49
    %v177 = vunpack.c.h.b16 %v49
    %v178 = vunpack.c.l.b16 %v50
    %v179 = vunpack.c.h.b16 %v50
    %v180 = vunpack.c.l.b16 %v51
    %v181 = vunpack.c.h.b16 %v51
    %v182 = vunpack.c.l.b16 %v52
    %v183 = vunpack.c.h.b16 %v52
    %v184 = vunpack.c.l.b16 %v53
    %v185 = vunpack.c.h.b16 %v53
    %v186 = vunpack.c.l.b16 %v54
    %v187 = vunpack.c.h.b16 %v54
    %v188 = vunpack.c.l.b16 %v55
    %v189 = vunpack.c.h.b16 %v55
    %v190 = vunpack.c.l.b16 %v56
    %v191 = vunpack.c.h.b16 %v56
    %v192 = vunpack.c.l.b16 %v57
    %v193 = vunpack.c.h.b16 %v57
    %v194 = vunpack.c.l.b16 %v58
    %v195 = vunpack.c.h.b16 %v58
    %v196 = vunpack.c.l.b16 %v59
    %v197 = vunpack.c.h.b16 %v59
    %v198 = vunpack.c.l.b16 %v60
    %v199 = vunpack.c.h.b16 %v60
    %v200 = vunpack.c.l.b16 %v61
    %v201 = vunpack.c.h.b16 %v61
    %v202 = vunpack.c.l.b16 %v62
    %v203 = vunpack.c.h.b16 %v62
    %v204 = vunpack.c.l.b16 %v63
    %v205 = vunpack.c.h.b16 %v63
    %v206 = vunpack.c.l.b16 %v64
    %v207 = vunpack.c.h.b16 %v64
    %v208 = vunpack.c.l.b16 %v65
    %v209 = vunpack.c.h.b16 %v65
    %v210 = vpack.c.b16 %v126, %v114
    %v211 = vpack.c.b16 %v127, %v115
    %v212 = vpack.c.b16 %v128, %v116
    %v213 = vpack.c.b16 %v129, %v117
    %v214 = vpack.c.b16 %v130, %v118
    %v215 = vpack.c.b16 %v131, %v119
    %v216 = vpack.c.b16 %v132, %v120
    %v217 = vpack.c.b16 %v133, %v121
    %v218 = vpack.c.b16 %v134, %v122
    %v219 = vpack.c.b16 %v135, %v123
    %v220 = vpack.c.b16 %v136, %v124
    %v221 = vpack.c.b16 %v137, %v125
    %v222 = vpack.c.b16 %v150, %v138
    %v223 = vpack.c.b16 %v151, %v139
    %v224 = vpack.c.b16 %v152, %v140
    %v225 = vpack.c.b16 %v153, %v141
    %v226 = vpack.c.b16 %v154, %v142
    %v227 = vpack.c.b16 %v155, %v143
    %v228 = vpack.c.b16 %v156, %v144
    %v229 = vpack.c.b16 %v157, %v145
    %v230 = vpack.c.b16 %v158, %v146
    %v231 = vpack.c.b16 %v159, %v147
    %v232 = vpack.c.b16 %v160, %v148
    %v233 = vpack.c.b16 %v161, %v149
    %v234 = vpack.c.b16 %v174, %v162
    %v235 = vpack.c.b16 %v175, %v163
    %v236 = vpack.c.b16 %v176, %v164
    %v237 = vpack.c.b16 %v177, %v165
    %v238 = vpack.c.b16 %v178, %v166
    %v239 = vpack.c.b16 %v179, %v167
    %v240 = vpack.c.b16 %v180, %v168
    %v241 = vpack.c.b16 %v181, %v169
    %v242 = vpack.c.b16 %v182, %v170
    %v243 = vpack.c.b16 %v183, %v171
    %v244 = vpack.c.b16 %v184, %v172
    %v245 = vpack.c.b16 %v185, %v173
    %v246 = vpack.c.b16 %v198, %v186
    %v247 = vpack.c.b16 %v199, %v187
    %v248 = vpack.c.b16 %v200, %v188
    %v249 = vpack.c.b16 %v201, %v189
    %v250 = vpack.c.b16 %v202, %v190
    %v251 = vpack.c.b16 %v203, %v191
    %v252 = vpack.c.b16 %v204, %v192
    %v253 = vpack.c.b16 %v205, %v193
    %v254 = vpack.c.b16 %v206, %v194
    %v255 = vpack.c.b16 %v207, %v195
    %v256 = vpack.c.b16 %v208, %v196
    %v257 = vpack.c.b16 %v209, %v197
    %vm306 = vcmask 523264
    %v308 = vsel %vm306, %v17, 0
    %310 = vmatprep.subr.bf16.mxu0 %v211
    %311 = vmatpush1.bf16.msra.mxu0 %v210
    %312 = vmatprep.subr.bf16.mxu0 %v223
    %313 = vmatpush1.bf16.msra.mxu0 %v222
    %314 = vmatprep.subr.bf16.mxu0 %v235
    %315 = vmatpush1.bf16.msra.mxu0 %v234
    %316 = vmatprep.subr.bf16.mxu0 %v247
    %317 = vmatpush1.bf16.msra.mxu0 %v246
    %318 = vmatprep.subr.bf16.mxu0 0
    %319 = vmatpush1.bf16.msra.mxu0 0
    %320 = vmatprep.subr.bf16.mxu0 0
    %321 = vmatpush1.bf16.msra.mxu0 0
    %322 = vmatprep.subr.bf16.mxu0 0
    %323 = vmatpush1.bf16.msra.mxu0 0
    %324 = vmatprep.subr.bf16.mxu0 0
    %325 = vmatpush1.bf16.msra.mxu0 0
    %326 = vmatprep.subr.bf16.mxu0 0
    %327 = vmatpush1.bf16.msra.mxu0 0
    %328 = vmatprep.subr.bf16.mxu0 0
    %329 = vmatpush1.bf16.msra.mxu0 0
    %330 = vmatprep.subr.bf16.mxu0 0
    %331 = vmatpush1.bf16.msra.mxu0 0
    %332 = vmatprep.subr.bf16.mxu0 0
    %333 = vmatpush1.bf16.msra.mxu0 0
    %334 = vmatprep.subr.bf16.mxu0 0
    %335 = vmatpush1.bf16.msra.mxu0 0
    %336 = vmatprep.subr.bf16.mxu0 0
    %337 = vmatpush1.bf16.msra.mxu0 0
    %338 = vmatprep.subr.bf16.mxu0 0
    %339 = vmatpush1.bf16.msra.mxu0 0
    %340 = vmatprep.subr.bf16.mxu0 0
    %341 = vmatpush1.bf16.msra.mxu0 0
    %342 = vmatprep.mubr.bf16.mxu0 0
    %343 = vmatmul.mubr.bf16.gmra.mrb[0].mxu0 %v308
    %v344 = vpop.f32.mrb[0].mxu0
    %v345 = vadd.f32 0.0, %v344
    %v346 = vpop.f32.mrb[0].mxu0
    %v347 = vadd.f32 0.0, %v346
    %v348 = vpop.f32.mrb[0].mxu0
    %v349 = vpop.f32.mrb[0].mxu0
    %350 = vdwg.mxu0
    %351 = vmatprep.subr.bf16.mxu0 %v213
    %352 = vmatpush1.bf16.msra.mxu0 %v212
    %353 = vmatprep.subr.bf16.mxu0 %v225
    %354 = vmatpush1.bf16.msra.mxu0 %v224
    %355 = vmatprep.subr.bf16.mxu0 %v237
    %356 = vmatpush1.bf16.msra.mxu0 %v236
    %357 = vmatprep.subr.bf16.mxu0 %v249
    %358 = vmatpush1.bf16.msra.mxu0 %v248
    %359 = vmatprep.subr.bf16.mxu0 0
    %360 = vmatpush1.bf16.msra.mxu0 0
    %361 = vmatprep.subr.bf16.mxu0 0
    %362 = vmatpush1.bf16.msra.mxu0 0
    %363 = vmatprep.subr.bf16.mxu0 0
    %364 = vmatpush1.bf16.msra.mxu0 0
    %365 = vmatprep.subr.bf16.mxu0 0
    %366 = vmatpush1.bf16.msra.mxu0 0
    %367 = vmatprep.subr.bf16.mxu0 0
    %368 = vmatpush1.bf16.msra.mxu0 0
    %369 = vmatprep.subr.bf16.mxu0 0
    %370 = vmatpush1.bf16.msra.mxu0 0
    %371 = vmatprep.subr.bf16.mxu0 0
    %372 = vmatpush1.bf16.msra.mxu0 0
    %373 = vmatprep.subr.bf16.mxu0 0
    %374 = vmatpush1.bf16.msra.mxu0 0
    %375 = vmatprep.subr.bf16.mxu0 0
    %376 = vmatpush1.bf16.msra.mxu0 0
    %377 = vmatprep.subr.bf16.mxu0 0
    %378 = vmatpush1.bf16.msra.mxu0 0
    %379 = vmatprep.subr.bf16.mxu0 0
    %380 = vmatpush1.bf16.msra.mxu0 0
    %381 = vmatprep.subr.bf16.mxu0 0
    %382 = vmatpush1.bf16.msra.mxu0 0
    %383 = vmatprep.mubr.bf16.mxu0 0
    %384 = vmatmul.mubr.bf16.gmra.mrb[0].mxu0 %v308
    %v385 = vpop.f32.mrb[0].mxu0
    %v386 = vadd.f32 0.0, %v385
    %v387 = vpop.f32.mrb[0].mxu0
    %v388 = vadd.f32 0.0, %v387
    %v389 = vpop.f32.mrb[0].mxu0
    %v390 = vpop.f32.mrb[0].mxu0
    %391 = vdwg.mxu0
    %392 = vmatprep.subr.bf16.mxu0 %v215
    %393 = vmatpush1.bf16.msra.mxu0 %v214
    %394 = vmatprep.subr.bf16.mxu0 %v227
    %395 = vmatpush1.bf16.msra.mxu0 %v226
    %396 = vmatprep.subr.bf16.mxu0 %v239
    %397 = vmatpush1.bf16.msra.mxu0 %v238
    %398 = vmatprep.subr.bf16.mxu0 %v251
    %399 = vmatpush1.bf16.msra.mxu0 %v250
    %400 = vmatprep.subr.bf16.mxu0 0
    %401 = vmatpush1.bf16.msra.mxu0 0
    %402 = vmatprep.subr.bf16.mxu0 0
    %403 = vmatpush1.bf16.msra.mxu0 0
    %404 = vmatprep.subr.bf16.mxu0 0
    %405 = vmatpush1.bf16.msra.mxu0 0
    %406 = vmatprep.subr.bf16.mxu0 0
    %407 = vmatpush1.bf16.msra.mxu0 0
    %408 = vmatprep.subr.bf16.mxu0 0
    %409 = vmatpush1.bf16.msra.mxu0 0
    %410 = vmatprep.subr.bf16.mxu0 0
    %411 = vmatpush1.bf16.msra.mxu0 0
    %412 = vmatprep.subr.bf16.mxu0 0
    %413 = vmatpush1.bf16.msra.mxu0 0
    %414 = vmatprep.subr.bf16.mxu0 0
    %415 = vmatpush1.bf16.msra.mxu0 0
    %416 = vmatprep.subr.bf16.mxu0 0
    %417 = vmatpush1.bf16.msra.mxu0 0
    %418 = vmatprep.subr.bf16.mxu0 0
    %419 = vmatpush1.bf16.msra.mxu0 0
    %420 = vmatprep.subr.bf16.mxu0 0
    %421 = vmatpush1.bf16.msra.mxu0 0
    %422 = vmatprep.subr.bf16.mxu0 0
    %423 = vmatpush1.bf16.msra.mxu0 0
    %424 = vmatprep.mubr.bf16.mxu0 0
    %425 = vmatmul.mubr.bf16.gmra.mrb[0].mxu0 %v308
    %v426 = vpop.f32.mrb[0].mxu0
    %v427 = vadd.f32 0.0, %v426
    %v428 = vpop.f32.mrb[0].mxu0
    %v429 = vadd.f32 0.0, %v428
    %v430 = vpop.f32.mrb[0].mxu0
    %v431 = vpop.f32.mrb[0].mxu0
    %432 = vdwg.mxu0
    %433 = vmatprep.subr.bf16.mxu0 %v217
    %434 = vmatpush1.bf16.msra.mxu0 %v216
    %435 = vmatprep.subr.bf16.mxu0 %v229
    %436 = vmatpush1.bf16.msra.mxu0 %v228
    %437 = vmatprep.subr.bf16.mxu0 %v241
    %438 = vmatpush1.bf16.msra.mxu0 %v240
    %439 = vmatprep.subr.bf16.mxu0 %v253
    %440 = vmatpush1.bf16.msra.mxu0 %v252
    %441 = vmatprep.subr.bf16.mxu0 0
    %442 = vmatpush1.bf16.msra.mxu0 0
    %443 = vmatprep.subr.bf16.mxu0 0
    %444 = vmatpush1.bf16.msra.mxu0 0
    %445 = vmatprep.subr.bf16.mxu0 0
    %446 = vmatpush1.bf16.msra.mxu0 0
    %447 = vmatprep.subr.bf16.mxu0 0
    %448 = vmatpush1.bf16.msra.mxu0 0
    %449 = vmatprep.subr.bf16.mxu0 0
    %450 = vmatpush1.bf16.msra.mxu0 0
    %451 = vmatprep.subr.bf16.mxu0 0
    %452 = vmatpush1.bf16.msra.mxu0 0
    %453 = vmatprep.subr.bf16.mxu0 0
    %454 = vmatpush1.bf16.msra.mxu0 0
    %455 = vmatprep.subr.bf16.mxu0 0
    %456 = vmatpush1.bf16.msra.mxu0 0
    %457 = vmatprep.subr.bf16.mxu0 0
    %458 = vmatpush1.bf16.msra.mxu0 0
    %459 = vmatprep.subr.bf16.mxu0 0
    %460 = vmatpush1.bf16.msra.mxu0 0
    %461 = vmatprep.subr.bf16.mxu0 0
    %462 = vmatpush1.bf16.msra.mxu0 0
    %463 = vmatprep.subr.bf16.mxu0 0
    %464 = vmatpush1.bf16.msra.mxu0 0
    %465 = vmatprep.mubr.bf16.mxu0 0
    %466 = vmatmul.mubr.bf16.gmra.mrb[0].mxu0 %v308
    %v467 = vpop.f32.mrb[0].mxu0
    %v468 = vadd.f32 0.0, %v467
    %v469 = vpop.f32.mrb[0].mxu0
    %v470 = vadd.f32 0.0, %v469
    %v471 = vpop.f32.mrb[0].mxu0
    %v472 = vpop.f32.mrb[0].mxu0
    %473 = vdwg.mxu0
    %474 = vmatprep.subr.bf16.mxu0 %v219
    %475 = vmatpush1.bf16.msra.mxu0 %v218
    %476 = vmatprep.subr.bf16.mxu0 %v231
    %477 = vmatpush1.bf16.msra.mxu0 %v230
    %478 = vmatprep.subr.bf16.mxu0 %v243
    %479 = vmatpush1.bf16.msra.mxu0 %v242
    %480 = vmatprep.subr.bf16.mxu0 %v255
    %481 = vmatpush1.bf16.msra.mxu0 %v254
    %482 = vmatprep.subr.bf16.mxu0 0
    %483 = vmatpush1.bf16.msra.mxu0 0
    %484 = vmatprep.subr.bf16.mxu0 0
    %485 = vmatpush1.bf16.msra.mxu0 0
    %486 = vmatprep.subr.bf16.mxu0 0
    %487 = vmatpush1.bf16.msra.mxu0 0
    %488 = vmatprep.subr.bf16.mxu0 0
    %489 = vmatpush1.bf16.msra.mxu0 0
    %490 = vmatprep.subr.bf16.mxu0 0
    %491 = vmatpush1.bf16.msra.mxu0 0
    %492 = vmatprep.subr.bf16.mxu0 0
    %493 = vmatpush1.bf16.msra.mxu0 0
    %494 = vmatprep.subr.bf16.mxu0 0
    %495 = vmatpush1.bf16.msra.mxu0 0
    %496 = vmatprep.subr.bf16.mxu0 0
    %497 = vmatpush1.bf16.msra.mxu0 0
    %498 = vmatprep.subr.bf16.mxu0 0
    %499 = vmatpush1.bf16.msra.mxu0 0
    %500 = vmatprep.subr.bf16.mxu0 0
    %501 = vmatpush1.bf16.msra.mxu0 0
    %502 = vmatprep.subr.bf16.mxu0 0
    %503 = vmatpush1.bf16.msra.mxu0 0
    %504 = vmatprep.subr.bf16.mxu0 0
    %505 = vmatpush1.bf16.msra.mxu0 0
    %506 = vmatprep.mubr.bf16.mxu0 0
    %507 = vmatmul.mubr.bf16.gmra.mrb[0].mxu0 %v308
    %v508 = vpop.f32.mrb[0].mxu0
    %v509 = vadd.f32 0.0, %v508
    %v510 = vpop.f32.mrb[0].mxu0
    %v511 = vadd.f32 0.0, %v510
    %v512 = vpop.f32.mrb[0].mxu0
    %v513 = vpop.f32.mrb[0].mxu0
    %514 = vdwg.mxu0
    %515 = vmatprep.subr.bf16.mxu0 %v221
    %516 = vmatpush1.bf16.msra.mxu0 %v220
    %517 = vmatprep.subr.bf16.mxu0 %v233
    %518 = vmatpush1.bf16.msra.mxu0 %v232
    %519 = vmatprep.subr.bf16.mxu0 %v245
    %520 = vmatpush1.bf16.msra.mxu0 %v244
    %521 = vmatprep.subr.bf16.mxu0 %v257
    %522 = vmatpush1.bf16.msra.mxu0 %v256
    %523 = vmatprep.subr.bf16.mxu0 0
    %524 = vmatpush1.bf16.msra.mxu0 0
    %525 = vmatprep.subr.bf16.mxu0 0
    %526 = vmatpush1.bf16.msra.mxu0 0
    %527 = vmatprep.subr.bf16.mxu0 0
    %528 = vmatpush1.bf16.msra.mxu0 0
    %529 = vmatprep.subr.bf16.mxu0 0
    %530 = vmatpush1.bf16.msra.mxu0 0
    %531 = vmatprep.subr.bf16.mxu0 0
    %532 = vmatpush1.bf16.msra.mxu0 0
    %533 = vmatprep.subr.bf16.mxu0 0
    %534 = vmatpush1.bf16.msra.mxu0 0
    %535 = vmatprep.subr.bf16.mxu0 0
    %536 = vmatpush1.bf16.msra.mxu0 0
    %537 = vmatprep.subr.bf16.mxu0 0
    %538 = vmatpush1.bf16.msra.mxu0 0
    %539 = vmatprep.subr.bf16.mxu0 0
    %540 = vmatpush1.bf16.msra.mxu0 0
    %541 = vmatprep.subr.bf16.mxu0 0
    %542 = vmatpush1.bf16.msra.mxu0 0
    %543 = vmatprep.subr.bf16.mxu0 0
    %544 = vmatpush1.bf16.msra.mxu0 0
    %545 = vmatprep.subr.bf16.mxu0 0
    %546 = vmatpush1.bf16.msra.mxu0 0
    %547 = vmatprep.mubr.bf16.mxu0 0
    %548 = vmatmul.mubr.bf16.gmra.mrb[0].mxu0 %v308
    %v549 = vpop.f32.mrb[0].mxu0
    %v550 = vadd.f32 0.0, %v549
    %v551 = vpop.f32.mrb[0].mxu0
    %v552 = vadd.f32 0.0, %v551
    %v553 = vpop.f32.mrb[0].mxu0
    %v554 = vpop.f32.mrb[0].mxu0
    %555 = vdwg.mxu0
    %v556 = vmax.f32 %v345, %v347
    %v557 = vmax.f32 %v556, %v386
    %v558 = vmax.f32 %v557, %v388
    %v559 = vmax.f32 %v558, %v427
    %v560 = vmax.f32 %v559, %v429
    %v561 = vmax.f32 %v560, %v468
    %v562 = vmax.f32 %v561, %v470
    %v563 = vmax.f32 %v562, %v509
    %v564 = vmax.f32 %v563, %v511
    %v565 = vmax.f32 %v564, %v550
    %v566 = vmax.f32 %v565, %v552
    %v567 = vld [vmem:[%s2] sm:$0x1]
    %v569 = vlaneseq
    %v570 = vshrl.u32 %v569, 7
    %v571 = vsub.s32 0, %v570
    %v572 = vrot.slane %v567, %v571
    %v574 = vadd.f32 %v566, %v572
    %v575 = vmax.f32 %v574, 0.0
    %vm576 = vcmask 58368
    %577 = vst.msk [vmem:[#allocation2] sm:$0x3] %vm576, %v575
    // Predicated region
    $region14: #{cnn_forward.1} parent=1 // pred_check
      _
    $region15: #{cnn_forward.1} parent=1 // pred_check_branch
      %579 = sbr.rel (0) target = $region17
    $region16: #{cnn_forward.1} parent=1 // pred_region
      %s581 = ssub.s32 32, 32
      %582 = vsyncadd [#allocation3], %s581
      %s584 = sshll.u32 [#allocation2], 4
      %s585 = int_to_ptr.vmem [resolvable:$true] %s584
      %587 = dma.vmem_to_hbm [thread:$0]  %s585, 32, %s3, [#allocation3]
    $region17: #{cnn_forward.1} parent=1 // pred_fallthru
      _
    // Predicated region
    $region18: #{cnn_forward.1} parent=1 // pred_check
      _
    $region19: #{cnn_forward.1} parent=1 // pred_check_branch
      %589 = sbr.rel (0) target = $region21
    $region20: #{cnn_forward.1} parent=1 // pred_region
      %590 = dma.done [#allocation3], 32
    $region21: #{cnn_forward.1} parent=1 // pred_fallthru
      _
    %591 = vsyncpa [#allocation3], 1

</llo_original>
